<compile_context>
chip_gen: v7x
topology: tpu7x:2x2x1
jax: 0.10.0
libtpu: 0.0.40
codegen_flags: <defaults>
</compile_context>

<pallas_src>
import jax
import jax.numpy as jnp
from jax.experimental import pallas as pl
from jax.experimental.pallas import tpu as pltpu


def _round_up(x, m):
    return ((x + m - 1) // m) * m


def value_net_kernel(x_ref, w1_ref, b1_ref, w2_ref, b2_ref, w3_ref, b3_ref, o_ref):
    wdt = w1_ref.dtype

    # Layer 1 (packed W1; cast the f32 activations to the weight dtype at the
    # dot input — cheap VPU pack hidden under the matmul, no wrapper cast).
    x = x_ref[...].astype(wdt)
    h1 = jnp.dot(x, w1_ref[...], preferred_element_type=jnp.float32) + b1_ref[...]
    h1 = jnp.maximum(h1, 0.0).astype(wdt)            # ReLU in f32, cast for MXU

    # Layer 2.
    h2 = jnp.dot(h1, w2_ref[...], preferred_element_type=jnp.float32) + b2_ref[...]
    h2 = jnp.maximum(h2, 0.0).astype(wdt)

    # Layer 3: contract h2's lane (hidden) dim against the (1, hp) W3 row.
    # Result is the lane-dense (1, tm) output row; only one LHS row goes
    # through the MXU (vs. a full tm/8-push pass for an N=1 matmul).
    out_row = jax.lax.dot_general(
        w3_ref[...], h2,
        dimension_numbers=(((1,), (1,)), ((), ())),
        preferred_element_type=jnp.float32)
    o_ref[...] = (out_row + b3_ref[0]).astype(o_ref.dtype)


def prepare_params(params, *, hidden_pad=128, dtype=jnp.bfloat16):
    """One-time prep: zero-pad the hidden dim to a lane-friendly multiple of 128
    and cast weights (not biases) to `dtype` (default bf16: 2x MXU throughput on
    every generation; accumulation stays f32). Padded bias columns are zero, so
    ReLU of the padding is exactly 0 and the pad contributes nothing downstream."""
    w1, b1, w2, b2, w3, b3 = params
    h = w1.shape[1]
    hp = _round_up(h, hidden_pad)
    ph = hp - h

    w1p = jnp.pad(w1, ((0, 0), (0, ph)))
    b1p = jnp.pad(b1.reshape(1, h), ((0, 0), (0, ph))).astype(jnp.float32)
    w2p = jnp.pad(w2, ((0, ph), (0, ph)))
    b2p = jnp.pad(b2.reshape(1, h), ((0, 0), (0, ph))).astype(jnp.float32)
    w3p = jnp.pad(w3.reshape(h, 1), ((0, ph), (0, 0))).T          # (1, hp) row
    b3p = b3.reshape(1).astype(jnp.float32)                       # scalar -> SMEM

    cast = lambda a: a.astype(dtype)                  # weights only; biases f32
    return (cast(w1p), b1p, cast(w2p), b2p, cast(w3p), b3p)


def _tile_rows(B, block_rows):
    sub = 8  # activations stream in as f32 -> 8-sublane granule
    if B <= sub:
        return B                                      # one tiny full-batch block
    if B <= 2 * block_rows:
        # Aim for >=2 grid steps so both v7x TensorCores get work
        # (one extra ~0.35us step is noise on single-TC v5e/v6e).
        return min(_round_up(-(-B // 2), sub), _round_up(B, sub))
    return block_rows


def value_network_forward(state, action, prepared_params, *, block_rows=1024):
    """state: (B, num_inputs), action: (B, num_actions) -> (B, 1) float32."""
    w1, b1, w2, b2, w3, b3 = prepared_params
    d_in, hp = w1.shape
    B = state.shape[0]
    assert state.shape[1] + action.shape[1] == d_in

    # Tiny contiguous concat in the wrapper lets layer 1 be a single MXU pass
    # over a packed W1 (vs. two tiny-K passes). No dtype cast here: the cast to
    # the weight dtype happens inside the kernel at the dot input.
    x = jnp.concatenate([state.astype(jnp.float32),
                         action.astype(jnp.float32)], axis=1)

    tm = _tile_rows(B, block_rows)
    num_tiles = pl.cdiv(B, tm)

    const = lambda i: (0, 0)
    in_specs = [
        pl.BlockSpec((tm, d_in), lambda i: (i, 0)),           # activation tile
        pl.BlockSpec((d_in, hp), const),                      # W1 (VMEM-resident)
        pl.BlockSpec((1, hp), const),                         # b1 (f32)
        pl.BlockSpec((hp, hp), const),                        # W2 (VMEM-resident)
        pl.BlockSpec((1, hp), const),                         # b2 (f32)
        pl.BlockSpec((1, hp), const),                         # W3 row
        pl.BlockSpec(memory_space=pltpu.MemorySpace.SMEM),    # b3 scalar
    ]
    # Lane-dense output: one (1, tm) row per grid step; wrapper restores (B, 1).
    out_specs = pl.BlockSpec((1, tm), lambda i: (i, 0))

    flops = 2 * B * (d_in * hp + hp * hp + hp)
    bytes_accessed = (
        B * d_in * 4
        + sum(int(a.size) * a.dtype.itemsize for a in prepared_params)
        + num_tiles * tm * 4)

    out = pl.pallas_call(
        value_net_kernel,
        out_shape=jax.ShapeDtypeStruct((num_tiles, tm), jnp.float32),
        grid=(num_tiles,),
        in_specs=in_specs,
        out_specs=out_specs,
        compiler_params=pltpu.CompilerParams(
            dimension_semantics=("parallel",)),
        cost_estimate=pl.CostEstimate(
            flops=int(flops), transcendentals=0,
            bytes_accessed=int(bytes_accessed)),
    )(x, w1, b1, w2, b2, w3, b3)

    # Rows past B in the last (partial) tile are garbage; slice them off.
    return out.reshape(-1)[:B].reshape(B, 1)


def init_params(key, num_inputs, num_actions, hidden_size, init_w=0.003):
    """Mirror PyTorch defaults: uniform +/- 1/sqrt(fan_in), final layer +/- init_w."""
    d_in = num_inputs + num_actions
    k1, k2, k3, k4, k5, k6 = jax.random.split(key, 6)

    def unif(k, shape, bound):
        return jax.random.uniform(k, shape, jnp.float32, -bound, bound)

    bound1 = 1.0 / jnp.sqrt(jnp.float32(d_in))
    bound2 = 1.0 / jnp.sqrt(jnp.float32(hidden_size))
    w1 = unif(k1, (d_in, hidden_size), bound1)
    b1 = unif(k2, (1, hidden_size), bound1)
    w2 = unif(k3, (hidden_size, hidden_size), bound2)
    b2 = unif(k4, (1, hidden_size), bound2)
    w3 = unif(k5, (hidden_size, 1), init_w)
    b3 = unif(k6, (1, 1), init_w)
    return (w1, b1, w2, b2, w3, b3)


if __name__ == "__main__":
    num_inputs, num_actions, hidden_size = 12, 4, 32

    key = jax.random.PRNGKey(0)
    k_params, k_data = jax.random.split(key)
    params = init_params(k_params, num_inputs, num_actions, hidden_size)

    def reference(state, action):
        w1, b1, w2, b2, w3, b3 = params
        xr = jnp.concatenate([state, action], axis=1)
        h = jnp.maximum(xr @ w1 + b1, 0.0)
        h = jnp.maximum(h @ w2 + b2, 0.0)
        return h @ w3 + b3

    prepared_f32 = prepare_params(params, dtype=jnp.float32)   # exact-math path
    prepared_bf16 = prepare_params(params)                     # default: bf16 weights

    # batch=8 -> single tiny tile; batch=20 -> 2 grid steps with a partial tile.
    for batch in (8, 20):
        ks, ka = jax.random.split(jax.random.fold_in(k_data, batch))
        state = jax.random.normal(ks, (batch, num_inputs), jnp.float32)
        action = jax.random.normal(ka, (batch, num_actions), jnp.float32)
        ref = reference(state, action)

        out32 = jax.block_until_ready(value_network_forward(state, action, prepared_f32))
        assert out32.shape == (batch, 1)
        assert jnp.allclose(out32, ref, atol=1e-5, rtol=1e-5)

        out16 = jax.block_until_ready(value_network_forward(state, action, prepared_bf16))
        assert out16.shape == (batch, 1)
        # Loose tolerance: bf16 operands, f32 accumulation (f32 path above is the
        # tight correctness check).
        assert jnp.allclose(out16, ref, atol=2e-2, rtol=5e-2)

    print("KERNEL_OK")
</pallas_src>

<mosaic_0001>
module attributes {stable_mosaic.version = 11 : i64} {
  func.func @value_net_kernel(%arg0: i32, %arg1: memref<8x16xf32, #tpu.memory_space<vmem>>, %arg2: memref<16x128xf32, #tpu.memory_space<vmem>>, %arg3: memref<1x128xf32, #tpu.memory_space<vmem>>, %arg4: memref<128x128xf32, #tpu.memory_space<vmem>>, %arg5: memref<1x128xf32, #tpu.memory_space<vmem>>, %arg6: memref<1x128xf32, #tpu.memory_space<vmem>>, %arg7: memref<1xf32, #tpu.memory_space<smem>>, %arg8: memref<1x8xf32, #tpu.memory_space<vmem>>) attributes {dimension_semantics = [#tpu.dimension_semantics<parallel>], iteration_bounds = array<i64: 1>, scalar_prefetch = 0 : i64, scratch_operands = 0 : i64, tpu.core_type = #tpu.core_type<tc>, window_params = [{transform_indices = @transform_0, window_bounds = array<i64: 8, 16>}, {pipeline_mode = #tpu.pipeline_mode<synchronous>, transform_indices = @transform_1, window_bounds = array<i64: 16, 128>}, {pipeline_mode = #tpu.pipeline_mode<synchronous>, transform_indices = @transform_2, window_bounds = array<i64: 1, 128>}, {pipeline_mode = #tpu.pipeline_mode<synchronous>, transform_indices = @transform_3, window_bounds = array<i64: 128, 128>}, {pipeline_mode = #tpu.pipeline_mode<synchronous>, transform_indices = @transform_4, window_bounds = array<i64: 1, 128>}, {pipeline_mode = #tpu.pipeline_mode<synchronous>, transform_indices = @transform_5, window_bounds = array<i64: 1, 128>}, {transform_indices = @transform_6, window_bounds = array<i64: 1>}, {transform_indices = @transform_7, window_bounds = array<i64: 1, 8>}]} {
    %c0 = arith.constant 0 : index
    %c0_0 = arith.constant 0 : index
    %0 = vector.load %arg1[%c0, %c0_0] : memref<8x16xf32, #tpu.memory_space<vmem>>, vector<8x16xf32>
    %c0_1 = arith.constant 0 : index
    %c0_2 = arith.constant 0 : index
    %1 = vector.load %arg2[%c0_1, %c0_2] : memref<16x128xf32, #tpu.memory_space<vmem>>, vector<16x128xf32>
    %cst = arith.constant dense<0.000000e+00> : vector<8x128xf32>
    %2 = tpu.matmul %0, %1, %cst {dimension_numbers = #tpu.dot_dimension_numbers<[1], [0], [0], [1], [0, 0, 1, 1], [], []>} : vector<8x16xf32>, vector<16x128xf32>, vector<8x128xf32> -> vector<8x128xf32>
    %c0_3 = arith.constant 0 : index
    %c0_4 = arith.constant 0 : index
    %3 = vector.load %arg3[%c0_3, %c0_4] : memref<1x128xf32, #tpu.memory_space<vmem>>, vector<1x128xf32>
    %4 = vector.broadcast %3 : vector<1x128xf32> to vector<8x128xf32>
    %5 = arith.addf %2, %4 : vector<8x128xf32>
    %cst_5 = arith.constant 0.000000e+00 : f32
    %6 = vector.broadcast %cst_5 : f32 to vector<8x128xf32>
    %7 = arith.maximumf %5, %6 : vector<8x128xf32>
    %c0_6 = arith.constant 0 : index
    %c0_7 = arith.constant 0 : index
    %8 = vector.load %arg4[%c0_6, %c0_7] : memref<128x128xf32, #tpu.memory_space<vmem>>, vector<128x128xf32>
    %cst_8 = arith.constant dense<0.000000e+00> : vector<8x128xf32>
    %9 = tpu.matmul %7, %8, %cst_8 {dimension_numbers = #tpu.dot_dimension_numbers<[1], [0], [0], [1], [0, 0, 1, 1], [], []>} : vector<8x128xf32>, vector<128x128xf32>, vector<8x128xf32> -> vector<8x128xf32>
    %c0_9 = arith.constant 0 : index
    %c0_10 = arith.constant 0 : index
    %10 = vector.load %arg5[%c0_9, %c0_10] : memref<1x128xf32, #tpu.memory_space<vmem>>, vector<1x128xf32>
    %11 = vector.broadcast %10 : vector<1x128xf32> to vector<8x128xf32>
    %12 = arith.addf %9, %11 : vector<8x128xf32>
    %cst_11 = arith.constant 0.000000e+00 : f32
    %13 = vector.broadcast %cst_11 : f32 to vector<8x128xf32>
    %14 = arith.maximumf %12, %13 : vector<8x128xf32>
    %c0_12 = arith.constant 0 : index
    %c0_13 = arith.constant 0 : index
    %15 = vector.load %arg6[%c0_12, %c0_13] : memref<1x128xf32, #tpu.memory_space<vmem>>, vector<1x128xf32>
    %cst_14 = arith.constant dense<0.000000e+00> : vector<1x8xf32>
    %16 = tpu.matmul %15, %14, %cst_14 {dimension_numbers = #tpu.dot_dimension_numbers<[1], [1], [0], [0], [0, 0, 1, 0], [], []>} : vector<1x128xf32>, vector<8x128xf32>, vector<1x8xf32> -> vector<1x8xf32>
    %c0_15 = arith.constant 0 : index
    %17 = memref.load %arg7[%c0_15] : memref<1xf32, #tpu.memory_space<smem>>
    %18 = vector.broadcast %17 : f32 to vector<1x8xf32>
    %19 = arith.addf %16, %18 : vector<1x8xf32>
    %c0_16 = arith.constant 0 : index
    %c0_17 = arith.constant 0 : index
    %20 = vector.load %arg8[%c0_16, %c0_17] : memref<1x8xf32, #tpu.memory_space<vmem>>, vector<1x8xf32>
    tpu.vector_store %arg8[%c0_16, %c0_17], %19 {strides = array<i32>} : memref<1x8xf32, #tpu.memory_space<vmem>>, vector<1x8xf32>,
    return
  }
  func.func @transform_0(%arg0: i32) -> (i32, i32) {
    %c0_i32 = arith.constant 0 : i32
    %c0_i32_0 = arith.constant 0 : i32
    return %arg0, %c0_i32 : i32, i32
  }
  func.func @transform_1(%arg0: i32) -> (i32, i32) {
    %c0_i32 = arith.constant 0 : i32
    %c0_i32_0 = arith.constant 0 : i32
    %c0_i32_1 = arith.constant 0 : i32
    return %c0_i32, %c0_i32_0 : i32, i32
  }
  func.func @transform_2(%arg0: i32) -> (i32, i32) {
    %c0_i32 = arith.constant 0 : i32
    %c0_i32_0 = arith.constant 0 : i32
    %c0_i32_1 = arith.constant 0 : i32
    return %c0_i32, %c0_i32_0 : i32, i32
  }
  func.func @transform_3(%arg0: i32) -> (i32, i32) {
    %c0_i32 = arith.constant 0 : i32
    %c0_i32_0 = arith.constant 0 : i32
    %c0_i32_1 = arith.constant 0 : i32
    return %c0_i32, %c0_i32_0 : i32, i32
  }
  func.func @transform_4(%arg0: i32) -> (i32, i32) {
    %c0_i32 = arith.constant 0 : i32
    %c0_i32_0 = arith.constant 0 : i32
    %c0_i32_1 = arith.constant 0 : i32
    return %c0_i32, %c0_i32_0 : i32, i32
  }
  func.func @transform_5(%arg0: i32) -> (i32, i32) {
    %c0_i32 = arith.constant 0 : i32
    %c0_i32_0 = arith.constant 0 : i32
    %c0_i32_1 = arith.constant 0 : i32
    return %c0_i32, %c0_i32_0 : i32, i32
  }
  func.func @transform_6(%arg0: i32) -> i32 {
    %c0_i32 = arith.constant 0 : i32
    %c0_i32_0 = arith.constant 0 : i32
    return %c0_i32 : i32
  }
  func.func @transform_7(%arg0: i32) -> (i32, i32) {
    %c0_i32 = arith.constant 0 : i32
    %c0_i32_0 = arith.constant 0 : i32
    return %arg0, %c0_i32 : i32, i32
  }
}

</mosaic_0001>

<llo_original>
// kernel: tpu_custom_call.1
$region0: #{tpu_custom_call.1}
  #allocation0 [shape = 'u32[]', space=smem, size = 0x4, offset = 0x4, fixed_abs, tag = 'smem constant byte address 0x4 - core index']
  #allocation1 [shape = 'u32[144,128]{1,0:T(1,128)}', space=vmem, size = 0x12000, scoped, tag = 'internal scratch']
  #allocation2 [shape = 'f32[1]{0:T(128)S(6)}', space=smem, size = 0x200, scoped, tag = 'scoped memory for tpu_custom_call.1']
  %s0 = inlined_call_operand.hbm [shape: f32[8,16], index: 0, kind: input, shape index: {}]
  %s1 = inlined_call_operand.hbm [shape: f32[16,128], index: 1, kind: input, shape index: {}]
  %s2 = inlined_call_operand.vmem [shape: f32[1,128], index: 2, kind: input, shape index: {}]
  %s3 = inlined_call_operand.hbm [shape: f32[128,128], index: 3, kind: input, shape index: {}]
  %s4 = inlined_call_operand.vmem [shape: f32[1,128], index: 4, kind: input, shape index: {}]
  %s5 = inlined_call_operand.vmem [shape: f32[1,128], index: 5, kind: input, shape index: {}]
  %s6 = inlined_call_operand.<no memory space> [shape: f32[1], index: 6, kind: input, shape index: {}]
  %s7 = inlined_call_operand.hbm [shape: f32[1,8], index: 7, kind: output, shape index: {}]
  %s8 = sld [smem:[#allocation0]]
  $region50: #{tpu_custom_call.1} parent=0
    _
  %s10 = ssub.s32 1, %s8
  %s11 = scalar_select 0, %s10, %s8
  %12 = sst [smem:[#allocation2]] %s6
  $region1: #{tpu_custom_call.1} parent=0
    #allocation3 [shape = 'u8[4096]{0}', space=vmem, size = 0x1000, scoped, tag = 'input window, operand 0, single buffered']
    #allocation4 [shape = 's32[1]{0}', space=sflag, size = 0x4, scoped, tag = 'scoped memory for tpu_custom_call.1']
    #allocation5 [shape = 's32[1]{0}', space=sflag, size = 0x4, scoped, tag = 'scoped memory for tpu_custom_call.1']
    #allocation6 [shape = 'u8[8192]{0}', space=vmem, size = 0x2000, scoped, tag = 'input window, operand 1, single buffered']
    #allocation7 [shape = 's32[1]{0}', space=sflag, size = 0x4, scoped, tag = 'scoped memory for tpu_custom_call.1']
    #allocation8 [shape = 'u8[65536]{0}', space=vmem, size = 0x10000, scoped, tag = 'input window, operand 3, single buffered']
    #allocation9 [shape = 'u8[512]{0}', space=vmem, size = 0x400, scoped, tag = 'output window, operand 0, single buffered']
    %13 = vsyncpa [#allocation4], 0
    %14 = vsyncpa [#allocation7], 0
    %15 = vsyncpa [#allocation5], 0
    // Predicated region
    $region2: #{tpu_custom_call.1} parent=1 // pred_check
      _
    $region3: #{tpu_custom_call.1} parent=1 // pred_check_branch
      %17 = sbr.rel (0) target = $region5
    $region4: #{tpu_custom_call.1} parent=1 // pred_region
      %s19 = ssub.s32 128, 128
      %20 = vsyncadd [#allocation4], %s19
      %s22 = sshll.u32 [#allocation3], 4
      %s23 = int_to_ptr.vmem [resolvable:$true] %s22
      %25 = dma.hbm_to_vmem [thread:$0]  %s0, 128, %s23, [#allocation4]
    $region5: #{tpu_custom_call.1} parent=1 // pred_fallthru
      _
    // Predicated region
    $region6: #{tpu_custom_call.1} parent=1 // pred_check
      _
    $region7: #{tpu_custom_call.1} parent=1 // pred_check_branch
      %27 = sbr.rel (0) target = $region9
    $region8: #{tpu_custom_call.1} parent=1 // pred_region
      %s29 = ssub.s32 256, 256
      %30 = vsyncadd [#allocation7], %s29
      %s31 = sshll.u32 [#allocation6], 4
      %s32 = int_to_ptr.vmem [resolvable:$true] %s31
      %37 = dma.hbm_to_vmem [thread:$0]  %s1, 256, %s32, [#allocation7], 128, 128, 8
    $region9: #{tpu_custom_call.1} parent=1 // pred_fallthru
      _
    // Predicated region
    $region10: #{tpu_custom_call.1} parent=1 // pred_check
      _
    $region11: #{tpu_custom_call.1} parent=1 // pred_check_branch
      %39 = sbr.rel (0) target = $region13
    $region12: #{tpu_custom_call.1} parent=1 // pred_region
      _
    $region13: #{tpu_custom_call.1} parent=1 // pred_fallthru
      _
    // Predicated region
    $region14: #{tpu_custom_call.1} parent=1 // pred_check
      _
    $region15: #{tpu_custom_call.1} parent=1 // pred_check_branch
      %41 = sbr.rel (0) target = $region17
    $region16: #{tpu_custom_call.1} parent=1 // pred_region
      %s43 = ssub.s32 2048, 2048
      %44 = vsyncadd [#allocation7], %s43
      %s45 = sshll.u32 [#allocation8], 4
      %s46 = int_to_ptr.vmem [resolvable:$true] %s45
      %51 = dma.hbm_to_vmem [thread:$0]  %s3, 2048, %s46, [#allocation7], 128, 128, 8
    $region17: #{tpu_custom_call.1} parent=1 // pred_fallthru
      _
    // Predicated region
    $region18: #{tpu_custom_call.1} parent=1 // pred_check
      _
    $region19: #{tpu_custom_call.1} parent=1 // pred_check_branch
      %53 = sbr.rel (0) target = $region21
    $region20: #{tpu_custom_call.1} parent=1 // pred_region
      _
    $region21: #{tpu_custom_call.1} parent=1 // pred_fallthru
      _
    // Predicated region
    $region22: #{tpu_custom_call.1} parent=1 // pred_check
      _
    $region23: #{tpu_custom_call.1} parent=1 // pred_check_branch
      %55 = sbr.rel (0) target = $region25
    $region24: #{tpu_custom_call.1} parent=1 // pred_region
      _
    $region25: #{tpu_custom_call.1} parent=1 // pred_fallthru
      _
    // Predicated region
    $region26: #{tpu_custom_call.1} parent=1 // pred_check
      _
    $region27: #{tpu_custom_call.1} parent=1 // pred_check_branch
      %57 = sbr.rel (0) target = $region29
    $region28: #{tpu_custom_call.1} parent=1 // pred_region
      _
    $region29: #{tpu_custom_call.1} parent=1 // pred_fallthru
      _
    // Predicated region
    $region30: #{tpu_custom_call.1} parent=1 // pred_check
      _
    $region31: #{tpu_custom_call.1} parent=1 // pred_check_branch
      %59 = sbr.rel (0) target = $region33
    $region32: #{tpu_custom_call.1} parent=1 // pred_region
      %60 = dma.done [#allocation4], 128
    $region33: #{tpu_custom_call.1} parent=1 // pred_fallthru
      _
    // Predicated region
    $region34: #{tpu_custom_call.1} parent=1 // pred_check
      _
    $region35: #{tpu_custom_call.1} parent=1 // pred_check_branch
      %62 = sbr.rel (0) target = $region37
    $region36: #{tpu_custom_call.1} parent=1 // pred_region
      %63 = dma.done [#allocation7], 256
    $region37: #{tpu_custom_call.1} parent=1 // pred_fallthru
      _
    // Predicated region
    $region38: #{tpu_custom_call.1} parent=1 // pred_check
      _
    $region39: #{tpu_custom_call.1} parent=1 // pred_check_branch
      %65 = sbr.rel (0) target = $region41
    $region40: #{tpu_custom_call.1} parent=1 // pred_region
      %66 = dma.done [#allocation7], 2048
    $region41: #{tpu_custom_call.1} parent=1 // pred_fallthru
      _
    %v67 = vld [vmem:[#allocation3] sm:$0xff]
    %v68 = vld [vmem:[#allocation6] sm:$0xff]
    %v69 = vld [vmem:[#allocation6 + $0x8] sm:$0xff]
    %v70 = vld [vmem:[%s2] sm:$0x1]
    %v72 = vlaneseq
    %v73 = vshrl.u32 %v72, 7
    %v74 = vsub.s32 0, %v73
    %v75 = vrot.slane %v70, %v74
    %vm77 = vcmask 130048
    %v79 = vsel %vm77, %v67, 0
    %81 = vmatprep.subr.mxu0 0.0
    %82 = vmatpush1.msra.mxu0 %v68
    %83 = vmatprep.subr.mxu0 0.0
    %84 = vmatpush1.msra.mxu0 %v69
    %85 = vmatprep.subr.mxu0 0.0
    %86 = vmatpush1.msra.mxu0 0.0
    %87 = vmatprep.subr.mxu0 0.0
    %88 = vmatpush1.msra.mxu0 0.0
    %89 = vmatprep.subr.mxu0 0.0
    %90 = vmatpush1.msra.mxu0 0.0
    %91 = vmatprep.subr.mxu0 0.0
    %92 = vmatpush1.msra.mxu0 0.0
    %93 = vmatprep.subr.mxu0 0.0
    %94 = vmatpush1.msra.mxu0 0.0
    %95 = vmatprep.subr.mxu0 0.0
    %96 = vmatpush1.msra.mxu0 0.0
    %97 = vmatprep.subr.mxu0 0.0
    %98 = vmatpush1.msra.mxu0 0.0
    %99 = vmatprep.subr.mxu0 0.0
    %100 = vmatpush1.msra.mxu0 0.0
    %101 = vmatprep.subr.mxu0 0.0
    %102 = vmatpush1.msra.mxu0 0.0
    %103 = vmatprep.subr.mxu0 0.0
    %104 = vmatpush1.msra.mxu0 0.0
    %105 = vmatprep.subr.mxu0 0.0
    %106 = vmatpush1.msra.mxu0 0.0
    %107 = vmatprep.subr.mxu0 0.0
    %108 = vmatpush1.msra.mxu0 0.0
    %109 = vmatprep.subr.mxu0 0.0
    %110 = vmatpush1.msra.mxu0 0.0
    %111 = vmatprep.subr.mxu0 0.0
    %112 = vmatpush1.msra.mxu0 0.0
    %113 = vmatprep.subr.mxu0 0.0
    %114 = vmatpush1.msra.mxu0 0.0
    %115 = vmatprep.subr.mxu0 0.0
    %116 = vmatpush1.msra.mxu0 0.0
    %117 = vmatprep.subr.mxu0 0.0
    %118 = vmatpush1.msra.mxu0 0.0
    %119 = vmatprep.subr.mxu0 0.0
    %120 = vmatpush1.msra.mxu0 0.0
    %121 = vmatprep.subr.mxu0 0.0
    %122 = vmatpush1.msra.mxu0 0.0
    %123 = vmatprep.subr.mxu0 0.0
    %124 = vmatpush1.msra.mxu0 0.0
    %125 = vmatprep.subr.mxu0 0.0
    %126 = vmatpush1.msra.mxu0 0.0
    %127 = vmatprep.subr.mxu0 0.0
    %128 = vmatpush1.msra.mxu0 0.0
    %129 = vmatprep.subr.mxu0 0.0
    %130 = vmatpush1.msra.mxu0 0.0
    %131 = vmatprep.subr.mxu0 0.0
    %132 = vmatpush1.msra.mxu0 0.0
    %133 = vmatprep.subr.mxu0 0.0
    %134 = vmatpush1.msra.mxu0 0.0
    %135 = vmatprep.subr.mxu0 0.0
    %136 = vmatpush1.msra.mxu0 0.0
    %137 = vmatprep.subr.mxu0 0.0
    %138 = vmatpush1.msra.mxu0 0.0
    %139 = vmatprep.subr.mxu0 0.0
    %140 = vmatpush1.msra.mxu0 0.0
    %141 = vmatprep.subr.mxu0 0.0
    %142 = vmatpush1.msra.mxu0 0.0
    %143 = vmatprep.subr.mxu0 0.0
    %144 = vmatpush1.msra.mxu0 0.0
    %145 = vmatprep.mubr.f32.mxu0 0.0
    %146 = vmatmul.mubr.f32.gmra.mrb[0].mxu0 %v79
    %v147 = vpop.f32.mrb[0].mxu0
    %v148 = vadd.f32 %v75, %v147
    %v149 = vpop.f32.mrb[0].mxu0
    %150 = vdwg.mxu0
    %v151 = vmax.f32 %v148, 0.0
    %v152 = vld [vmem:[#allocation8] sm:$0xff]
    %v153 = vld [vmem:[#allocation8 + $0x8] sm:$0xff]
    %v154 = vld [vmem:[#allocation8 + $0x10] sm:$0xff]
    %v155 = vld [vmem:[#allocation8 + $0x18] sm:$0xff]
    %v156 = vld [vmem:[#allocation8 + $0x20] sm:$0xff]
    %v157 = vld [vmem:[#allocation8 + $0x28] sm:$0xff]
    %v158 = vld [vmem:[#allocation8 + $0x30] sm:$0xff]
    %v159 = vld [vmem:[#allocation8 + $0x38] sm:$0xff]
    %v160 = vld [vmem:[#allocation8 + $0x40] sm:$0xff]
    %v161 = vld [vmem:[#allocation8 + $0x48] sm:$0xff]
    %v162 = vld [vmem:[#allocation8 + $0x50] sm:$0xff]
    %v163 = vld [vmem:[#allocation8 + $0x58] sm:$0xff]
    %v164 = vld [vmem:[#allocation8 + $0x60] sm:$0xff]
    %v165 = vld [vmem:[#allocation8 + $0x68] sm:$0xff]
    %v166 = vld [vmem:[#allocation8 + $0x70] sm:$0xff]
    %v167 = vld [vmem:[#allocation8 + $0x78] sm:$0xff]
    %v168 = vld [vmem:[%s4] sm:$0x1]
    %v170 = vlaneseq
    %v171 = vshrl.u32 %v170, 7
    %v172 = vsub.s32 0, %v171
    %v173 = vrot.slane %v168, %v172
    %175 = vmatprep.subr.mxu0 0.0
    %176 = vmatpush1.msra.mxu0 %v152
    %177 = vmatprep.subr.mxu0 0.0
    %178 = vmatpush1.msra.mxu0 %v153
    %179 = vmatprep.subr.mxu0 0.0
    %180 = vmatpush1.msra.mxu0 %v154
    %181 = vmatprep.subr.mxu0 0.0
    %182 = vmatpush1.msra.mxu0 %v155
    %183 = vmatprep.subr.mxu0 0.0
    %184 = vmatpush1.msra.mxu0 %v156
    %185 = vmatprep.subr.mxu0 0.0
    %186 = vmatpush1.msra.mxu0 %v157
    %187 = vmatprep.subr.mxu0 0.0
    %188 = vmatpush1.msra.mxu0 %v158
    %189 = vmatprep.subr.mxu0 0.0
    %190 = vmatpush1.msra.mxu0 %v159
    %191 = vmatprep.subr.mxu0 0.0
    %192 = vmatpush1.msra.mxu0 %v160
    %193 = vmatprep.subr.mxu0 0.0
    %194 = vmatpush1.msra.mxu0 %v161
    %195 = vmatprep.subr.mxu0 0.0
    %196 = vmatpush1.msra.mxu0 %v162
    %197 = vmatprep.subr.mxu0 0.0
    %198 = vmatpush1.msra.mxu0 %v163
    %199 = vmatprep.subr.mxu0 0.0
    %200 = vmatpush1.msra.mxu0 %v164
    %201 = vmatprep.subr.mxu0 0.0
    %202 = vmatpush1.msra.mxu0 %v165
    %203 = vmatprep.subr.mxu0 0.0
    %204 = vmatpush1.msra.mxu0 %v166
    %205 = vmatprep.subr.mxu0 0.0
    %206 = vmatpush1.msra.mxu0 %v167
    %207 = vmatprep.subr.mxu0 0.0
    %208 = vmatpush1.msra.mxu0 0.0
    %209 = vmatprep.subr.mxu0 0.0
    %210 = vmatpush1.msra.mxu0 0.0
    %211 = vmatprep.subr.mxu0 0.0
    %212 = vmatpush1.msra.mxu0 0.0
    %213 = vmatprep.subr.mxu0 0.0
    %214 = vmatpush1.msra.mxu0 0.0
    %215 = vmatprep.subr.mxu0 0.0
    %216 = vmatpush1.msra.mxu0 0.0
    %217 = vmatprep.subr.mxu0 0.0
    %218 = vmatpush1.msra.mxu0 0.0
    %219 = vmatprep.subr.mxu0 0.0
    %220 = vmatpush1.msra.mxu0 0.0
    %221 = vmatprep.subr.mxu0 0.0
    %222 = vmatpush1.msra.mxu0 0.0
    %223 = vmatprep.subr.mxu0 0.0
    %224 = vmatpush1.msra.mxu0 0.0
    %225 = vmatprep.subr.mxu0 0.0
    %226 = vmatpush1.msra.mxu0 0.0
    %227 = vmatprep.subr.mxu0 0.0
    %228 = vmatpush1.msra.mxu0 0.0
    %229 = vmatprep.subr.mxu0 0.0
    %230 = vmatpush1.msra.mxu0 0.0
    %231 = vmatprep.subr.mxu0 0.0
    %232 = vmatpush1.msra.mxu0 0.0
    %233 = vmatprep.subr.mxu0 0.0
    %234 = vmatpush1.msra.mxu0 0.0
    %235 = vmatprep.subr.mxu0 0.0
    %236 = vmatpush1.msra.mxu0 0.0
    %237 = vmatprep.subr.mxu0 0.0
    %238 = vmatpush1.msra.mxu0 0.0
    %239 = vmatprep.mubr.f32.mxu0 0.0
    %240 = vmatmul.mubr.f32.gmra.mrb[0].mxu0 %v151
    %v241 = vpop.f32.mrb[0].mxu0
    %v242 = vadd.f32 %v173, %v241
    %v243 = vpop.f32.mrb[0].mxu0
    %244 = vdwg.mxu0
    %v245 = vmax.f32 %v242, 0.0
    %v246 = vld [vmem:[%s5] sm:$0x1]
    %s247 = sld [smem:[#allocation2]]
    %v248 = vstv %s247
    %249 = vmatprep.subr.mxu0 0.0
    %250 = vmatpush1.xpose.msra.mxu0 %v245
    %251 = vmatprep.subr.mxu0 0.0
    %252 = vmatpush1.xpose.msra.mxu0 0.0
    %253 = vmatprep.subr.mxu0 0.0
    %254 = vmatpush1.xpose.msra.mxu0 0.0
    %255 = vmatprep.subr.mxu0 0.0
    %256 = vmatpush1.xpose.msra.mxu0 0.0
    %257 = vmatprep.subr.mxu0 0.0
    %258 = vmatpush1.xpose.msra.mxu0 0.0
    %259 = vmatprep.subr.mxu0 0.0
    %260 = vmatpush1.xpose.msra.mxu0 0.0
    %261 = vmatprep.subr.mxu0 0.0
    %262 = vmatpush1.xpose.msra.mxu0 0.0
    %263 = vmatprep.subr.mxu0 0.0
    %264 = vmatpush1.xpose.msra.mxu0 0.0
    %265 = vmatprep.subr.mxu0 0.0
    %266 = vmatpush1.xpose.msra.mxu0 0.0
    %267 = vmatprep.subr.mxu0 0.0
    %268 = vmatpush1.xpose.msra.mxu0 0.0
    %269 = vmatprep.subr.mxu0 0.0
    %270 = vmatpush1.xpose.msra.mxu0 0.0
    %271 = vmatprep.subr.mxu0 0.0
    %272 = vmatpush1.xpose.msra.mxu0 0.0
    %273 = vmatprep.subr.mxu0 0.0
    %274 = vmatpush1.xpose.msra.mxu0 0.0
    %275 = vmatprep.subr.mxu0 0.0
    %276 = vmatpush1.xpose.msra.mxu0 0.0
    %277 = vmatprep.subr.mxu0 0.0
    %278 = vmatpush1.xpose.msra.mxu0 0.0
    %279 = vmatprep.subr.mxu0 0.0
    %280 = vmatpush1.xpose.msra.mxu0 0.0
    %281 = vmatprep.subr.mxu0 0.0
    %282 = vmatpush1.xpose.msra.mxu0 0.0
    %283 = vmatprep.subr.mxu0 0.0
    %284 = vmatpush1.xpose.msra.mxu0 0.0
    %285 = vmatprep.subr.mxu0 0.0
    %286 = vmatpush1.xpose.msra.mxu0 0.0
    %287 = vmatprep.subr.mxu0 0.0
    %288 = vmatpush1.xpose.msra.mxu0 0.0
    %289 = vmatprep.subr.mxu0 0.0
    %290 = vmatpush1.xpose.msra.mxu0 0.0
    %291 = vmatprep.subr.mxu0 0.0
    %292 = vmatpush1.xpose.msra.mxu0 0.0
    %293 = vmatprep.subr.mxu0 0.0
    %294 = vmatpush1.xpose.msra.mxu0 0.0
    %295 = vmatprep.subr.mxu0 0.0
    %296 = vmatpush1.xpose.msra.mxu0 0.0
    %297 = vmatprep.subr.mxu0 0.0
    %298 = vmatpush1.xpose.msra.mxu0 0.0
    %299 = vmatprep.subr.mxu0 0.0
    %300 = vmatpush1.xpose.msra.mxu0 0.0
    %301 = vmatprep.subr.mxu0 0.0
    %302 = vmatpush1.xpose.msra.mxu0 0.0
    %303 = vmatprep.subr.mxu0 0.0
    %304 = vmatpush1.xpose.msra.mxu0 0.0
    %305 = vmatprep.subr.mxu0 0.0
    %306 = vmatpush1.xpose.msra.mxu0 0.0
    %307 = vmatprep.subr.mxu0 0.0
    %308 = vmatpush1.xpose.msra.mxu0 0.0
    %309 = vmatprep.subr.mxu0 0.0
    %310 = vmatpush1.xpose.msra.mxu0 0.0
    %311 = vmatprep.subr.mxu0 0.0
    %312 = vmatpush1.xpose.msra.mxu0 0.0
    %313 = vmatprep.mubr.f32.mxu0 0.0
    %314 = vmatmul.mubr.f32.gmra.mrb[0].mxu0 %v246
    %v315 = vpop.f32.mrb[0].mxu0
    %v316 = vadd.f32 %v248, %v315
    %v317 = vpop.f32.mrb[0].mxu0
    %318 = vdwg.mxu0
    %vm319 = vcmask 57344
    %320 = vst.msk [vmem:[#allocation9] sm:$0x1] %vm319, %v316
    // Predicated region
    $region42: #{tpu_custom_call.1} parent=1 // pred_check
      _
    $region43: #{tpu_custom_call.1} parent=1 // pred_check_branch
      %322 = sbr.rel (0) target = $region45
    $region44: #{tpu_custom_call.1} parent=1 // pred_region
      %s324 = ssub.s32 16, 16
      %325 = vsyncadd [#allocation5], %s324
      %s327 = sshll.u32 [#allocation9], 4
      %s328 = int_to_ptr.vmem [resolvable:$true] %s327
      %330 = dma.vmem_to_hbm [thread:$0]  %s328, 16, %s7, [#allocation5]
    $region45: #{tpu_custom_call.1} parent=1 // pred_fallthru
      _
    // Predicated region
    $region46: #{tpu_custom_call.1} parent=1 // pred_check
      _
    $region47: #{tpu_custom_call.1} parent=1 // pred_check_branch
      %332 = sbr.rel (0) target = $region49
    $region48: #{tpu_custom_call.1} parent=1 // pred_region
      %333 = dma.done [#allocation5], 16
    $region49: #{tpu_custom_call.1} parent=1 // pred_fallthru
      _
    %334 = vsyncpa [#allocation4], 1
    %335 = vsyncpa [#allocation7], 1
    %336 = vsyncpa [#allocation5], 1

</llo_original>
